<compile_context>
chip_gen: v7x
topology: tpu7x:2x2x1
jax: 0.10.0
libtpu: 0.0.40
codegen_flags: <defaults>
</compile_context>

<pallas_src>
import functools

import jax
import jax.numpy as jnp
from jax.experimental import pallas as pl
from jax.experimental.pallas import tpu as pltpu

LANE = 128  # vreg lane width


def _round_up(n, m):
    return ((n + m - 1) // m) * m


def linear_sigmoid_kernel(params_ref, x_ref, o_ref):
    # params_ref: SMEM f32[3] = [w0, w1, b]
    # x_ref:      VMEM [2, TILE_ROWS, 128] (per-feature lane-dense slabs)
    # o_ref:      VMEM [TILE_ROWS, 128]
    w0 = params_ref[0]
    w1 = params_ref[1]
    b = params_ref[2]
    x0 = x_ref[0].astype(jnp.float32)    # (TILE_ROWS, 128)
    x1 = x_ref[1].astype(jnp.float32)    # (TILE_ROWS, 128)
    z = x0 * w0 + x1 * w1 + b            # pure VPU FMAs, no MXU
    # sigmoid(z) = 1 / (1 + exp(-z)); exp and approx reciprocal both run on
    # the EUP slot (free in this HBM-bound kernel).
    e = jnp.exp(-z)
    o_ref[...] = pl.reciprocal(1.0 + e, approx=True).astype(o_ref.dtype)


def linear_classifier_forward(x, weight, bias, *, tile_rows=2048):
    """sigmoid(x @ weight.T + bias)

    x:      (B, 2) f32 or bf16
    weight: (1, 2) f32 (PyTorch nn.Linear layout)
    bias:   (1,)   f32
    returns (B, 1), same dtype as x
    """
    B, F = x.shape
    assert F == 2, "LinearClassifier expects 2 input features"
    dtype = x.dtype
    itemsize = jnp.dtype(dtype).itemsize
    sub = {4: 8, 2: 16, 1: 32}.get(itemsize, 8)   # sublane multiple per dtype

    # ---- lane-dense tiling ---------------------------------------------
    rows_needed = pl.cdiv(B, LANE)                     # ceil(B / 128)
    rows_sub = _round_up(rows_needed, sub)
    tr = _round_up(max(sub, min(tile_rows, rows_sub)), sub)
    if rows_sub >= 2 * sub:
        # Guarantee >= 2 grid blocks so "parallel" can shard the stream
        # across both TensorCores on v7x.
        tr = min(tr, _round_up(pl.cdiv(rows_sub, 2), sub))
    padded_rows = _round_up(rows_sub, tr)
    padded_B = padded_rows * LANE
    grid = (padded_rows // tr,)

    # ---- feature-major, lane-dense slabs: (2, padded_rows, 128) ---------
    # Pad only when needed; the transpose/reshape producer is allowed to be
    # fused into the pallas_call operand (allow_input_fusion below) so it is
    # not a separate materialized HBM pass under jit.
    x_p = x if padded_B == B else jnp.pad(x, ((0, padded_B - B), (0, 0)))
    x_slab = x_p.T.reshape(2, padded_rows, LANE)

    # ---- 3 scalar params in SMEM -----------------------------------------
    params = jnp.concatenate(
        [weight.reshape(-1), bias.reshape(-1)]).astype(jnp.float32)  # (3,)

    # ---- advisory cost + VMEM sizing --------------------------------------
    cost = pl.CostEstimate(
        flops=5 * padded_B,
        transcendentals=2 * padded_B,
        bytes_accessed=3 * padded_B * itemsize + 12,
    )
    block_bytes = 2 * tr * LANE * itemsize + tr * LANE * itemsize
    vmem_limit = int(min(max(2 * block_bytes + (1 << 20), 16 << 20), 48 << 20))

    out = pl.pallas_call(
        linear_sigmoid_kernel,
        out_shape=jax.ShapeDtypeStruct((padded_rows, LANE), dtype),
        grid_spec=pltpu.PrefetchScalarGridSpec(
            num_scalar_prefetch=0,
            grid=grid,
            in_specs=[
                pl.BlockSpec(memory_space=pltpu.MemorySpace.SMEM),   # params
                pl.BlockSpec((2, tr, LANE), lambda i: (0, i, 0)),    # x slabs
            ],
            out_specs=pl.BlockSpec((tr, LANE), lambda i: (i, 0)),
        ),
        compiler_params=pltpu.CompilerParams(
            dimension_semantics=("parallel",),
            allow_input_fusion=[False, True],
            vmem_limit_bytes=vmem_limit,
        ),
        cost_estimate=cost,
    )(params, x_slab)

    # Free reshape; slice only exists when padding was added (and fuses with
    # the consumer under jit).
    out_flat = out.reshape(padded_B, 1)
    if padded_B == B:
        return out_flat
    return out_flat[:B]


if __name__ == "__main__":
    key = jax.random.PRNGKey(0)
    kx, kw, kb, kx2, kx3 = jax.random.split(key, 5)

    # Deterministic parameter init (shapes from nn.Linear(2, 1)):
    #   weight: (out_features=1, in_features=2), bias: (1,)
    bound = 1.0 / jnp.sqrt(2.0)
    weight = jax.random.uniform(kw, (1, 2), jnp.float32, -bound, bound)
    bias = jax.random.uniform(kb, (1,), jnp.float32, -bound, bound)

    fwd = jax.jit(
        functools.partial(linear_classifier_forward),
        static_argnames=("tile_rows",),
    )

    # Small batch of 2-feature inputs (single grid step).
    x = jax.random.normal(kx, (8, 2), jnp.float32)
    out = jax.block_until_ready(fwd(x, weight, bias))
    ref = jax.nn.sigmoid(x @ weight.T + bias)
    assert out.shape == (8, 1)
    assert jnp.allclose(out, ref, atol=2e-3, rtol=2e-3)

    # Larger, non-multiple-of-128 batch with a small tile size to exercise
    # the gridded / padded path (3 grid steps).
    x2 = jax.random.normal(kx2, (3000, 2), jnp.float32)
    out2 = jax.block_until_ready(fwd(x2, weight, bias, tile_rows=8))
    ref2 = jax.nn.sigmoid(x2 @ weight.T + bias)
    assert out2.shape == (3000, 1)
    assert jnp.allclose(out2, ref2, atol=2e-3, rtol=2e-3)

    # bf16 inputs: lane-aligned batch (no pad, free reshape), halved HBM bytes.
    x3 = jax.random.normal(kx3, (2048, 2), jnp.float32).astype(jnp.bfloat16)
    out3 = jax.block_until_ready(fwd(x3, weight, bias))
    ref3 = jax.nn.sigmoid(x3.astype(jnp.float32) @ weight.T + bias)
    assert out3.shape == (2048, 1) and out3.dtype == jnp.bfloat16
    assert jnp.allclose(out3.astype(jnp.float32), ref3, atol=2e-2, rtol=2e-2)

    print("KERNEL_OK")
</pallas_src>

<mosaic_0001>
module attributes {stable_mosaic.version = 11 : i64} {
  func.func @linear_sigmoid_kernel(%arg0: i32, %arg1: memref<3xf32, #tpu.memory_space<smem>>, %arg2: memref<2x8x128xf32, #tpu.memory_space<vmem>>, %arg3: memref<8x128xf32, #tpu.memory_space<vmem>>) attributes {dimension_semantics = [#tpu.dimension_semantics<parallel>], iteration_bounds = array<i64: 1>, scalar_prefetch = 0 : i64, scratch_operands = 0 : i64, tpu.core_type = #tpu.core_type<tc>, window_params = [{transform_indices = @transform_0, window_bounds = array<i64: 3>}, {transform_indices = @transform_1, window_bounds = array<i64: 2, 8, 128>}, {transform_indices = @transform_2, window_bounds = array<i64: 8, 128>}]} {
    %c0 = arith.constant 0 : index
    %0 = memref.load %arg1[%c0] : memref<3xf32, #tpu.memory_space<smem>>
    %c1 = arith.constant 1 : index
    %1 = memref.load %arg1[%c1] : memref<3xf32, #tpu.memory_space<smem>>
    %c2 = arith.constant 2 : index
    %2 = memref.load %arg1[%c2] : memref<3xf32, #tpu.memory_space<smem>>
    %c0_0 = arith.constant 0 : index
    %c0_1 = arith.constant 0 : index
    %c0_2 = arith.constant 0 : index
    %3 = vector.load %arg2[%c0_0, %c0_1, %c0_2] : memref<2x8x128xf32, #tpu.memory_space<vmem>>, vector<1x8x128xf32>
    %4 = vector.shape_cast %3 : vector<1x8x128xf32> to vector<8x128xf32>
    %c1_3 = arith.constant 1 : index
    %c0_4 = arith.constant 0 : index
    %c0_5 = arith.constant 0 : index
    %5 = vector.load %arg2[%c1_3, %c0_4, %c0_5] : memref<2x8x128xf32, #tpu.memory_space<vmem>>, vector<1x8x128xf32>
    %6 = vector.shape_cast %5 : vector<1x8x128xf32> to vector<8x128xf32>
    %7 = vector.broadcast %0 : f32 to vector<8x128xf32>
    %8 = arith.mulf %4, %7 : vector<8x128xf32>
    %9 = vector.broadcast %1 : f32 to vector<8x128xf32>
    %10 = arith.mulf %6, %9 : vector<8x128xf32>
    %11 = arith.addf %8, %10 : vector<8x128xf32>
    %12 = vector.broadcast %2 : f32 to vector<8x128xf32>
    %13 = arith.addf %11, %12 : vector<8x128xf32>
    %cst = arith.constant 0.000000e+00 : f32
    %14 = vector.broadcast %cst : f32 to vector<8x128xf32>
    %15 = arith.subf %14, %13 : vector<8x128xf32>
    %16 = math.exp %15 : vector<8x128xf32>
    %cst_6 = arith.constant 1.000000e+00 : f32
    %17 = vector.broadcast %cst_6 : f32 to vector<8x128xf32>
    %18 = arith.addf %17, %16 : vector<8x128xf32>
    %19 = tpu.reciprocal %18 {approx = true} : vector<8x128xf32> -> vector<8x128xf32>
    %c0_7 = arith.constant 0 : index
    %c0_8 = arith.constant 0 : index
    %20 = vector.load %arg3[%c0_7, %c0_8] : memref<8x128xf32, #tpu.memory_space<vmem>>, vector<8x128xf32>
    tpu.vector_store %arg3[%c0_7, %c0_8], %19 {strides = array<i32>} : memref<8x128xf32, #tpu.memory_space<vmem>>, vector<8x128xf32>,
    return
  }
  func.func @transform_0(%arg0: i32) -> i32 {
    %c0_i32 = arith.constant 0 : i32
    %c0_i32_0 = arith.constant 0 : i32
    return %c0_i32 : i32
  }
  func.func @transform_1(%arg0: i32) -> (i32, i32, i32) {
    %c0_i32 = arith.constant 0 : i32
    %c0_i32_0 = arith.constant 0 : i32
    %c0_i32_1 = arith.constant 0 : i32
    return %c0_i32, %arg0, %c0_i32_0 : i32, i32, i32
  }
  func.func @transform_2(%arg0: i32) -> (i32, i32) {
    %c0_i32 = arith.constant 0 : i32
    %c0_i32_0 = arith.constant 0 : i32
    return %arg0, %c0_i32 : i32, i32
  }
}

</mosaic_0001>

<llo_original>
// kernel: linear_classifier_forward.2
$region0: #{linear_classifier_forward.2}
  #allocation0 [shape = 'u32[]', space=smem, size = 0x4, offset = 0x4, fixed_abs, tag = 'smem constant byte address 0x4 - core index']
  #allocation1 [shape = 'u32[144,128]{1,0:T(1,128)}', space=vmem, size = 0x12000, scoped, tag = 'internal scratch']
  %s0 = inlined_call_operand.vmem [shape: f32[3], index: 0, kind: input, shape index: {}]
  %s1 = inlined_call_operand.vmem [shape: f32[1,2,8,128], index: 1, kind: input, shape index: {}]
  %s2 = inlined_call_operand.vmem [shape: f32[8,128], index: 2, kind: output, shape index: {}]
  %s3 = sld [smem:[#allocation0]]
  $region22: #{linear_classifier_forward.2} parent=0
    _
  %s5 = ssub.s32 1, %s3
  %s6 = scalar_select 0, %s5, %s3
  $region1: #{linear_classifier_forward.2} parent=0
    #allocation2 [shape = 'u8[512]{0}', space=smem, size = 0x200, scoped, tag = 'input window, operand 0, single buffered']
    #allocation3 [shape = 's32[1]{0}', space=sflag, size = 0x4, scoped, tag = 'scoped memory for linear_classifier_forward.2']
    #allocation4 [shape = 'u8[8192]{0}', space=vmem, size = 0x2000, dematerialized = true, scoped, tag = 'FusionAdapter Buffer %fusion.1 = f32[2,8,128]{2,1,0:T(8,128)} fusion(%param_1.1), kind=kLoop, calls=%fused_computation.1.clone, metadata={op_name="jit(linear_classifier_forward)/reshape" stack_frame_id=8}']
    %7 = vsyncpa [#allocation3], 0
    // Predicated region
    $region2: #{linear_classifier_forward.2} parent=1 // pred_check
      _
    $region3: #{linear_classifier_forward.2} parent=1 // pred_check_branch
      %9 = sbr.rel (0) target = $region5
    $region4: #{linear_classifier_forward.2} parent=1 // pred_region
      %s11 = ssub.s32 16, 16
      %12 = vsyncadd [#allocation3], %s11
      %s14 = sshll.u32 %s0, 4
      %s15 = int_to_ptr.vmem [resolvable:$true] %s14
      %17 = dma.vmem_to_smem %s15, 16, [#allocation2], [#allocation3]
    $region5: #{linear_classifier_forward.2} parent=1 // pred_fallthru
      _
    // Predicated region
    $region6: #{linear_classifier_forward.2} parent=1 // pred_check
      _
    $region7: #{linear_classifier_forward.2} parent=1 // pred_check_branch
      %19 = sbr.rel (0) target = $region9
    $region8: #{linear_classifier_forward.2} parent=1 // pred_region
      _
    $region9: #{linear_classifier_forward.2} parent=1 // pred_fallthru
      _
    // Predicated region
    $region10: #{linear_classifier_forward.2} parent=1 // pred_check
      _
    $region11: #{linear_classifier_forward.2} parent=1 // pred_check_branch
      %21 = sbr.rel (0) target = $region13
    $region12: #{linear_classifier_forward.2} parent=1 // pred_region
      %22 = dma.done [#allocation3], 16
    $region13: #{linear_classifier_forward.2} parent=1 // pred_fallthru
      _
    %23 = sfence
    %v24 = vld [vmem:[%s1] sm:$0xff]
    %26 = vst [vmem:[#allocation4] sm:$0xff] %v24
    %s27 = scalar_lea.vmem %s1, 8
    %v28 = vld [vmem:[%s27] sm:$0xff]
    %s29 = scalar_lea.vmem [#allocation4], 8
    %31 = vst [vmem:[%s29] sm:$0xff] %v28
    %s32 = sld [smem:[#allocation2]]
    %s33 = sld [smem:[#allocation2 + $0x1]]
    %s34 = sld [smem:[#allocation2 + $0x2]]
    %v35 = vld [vmem:[#allocation4] sm:$0xff]
    %s36 = scalar_lea.vmem [#allocation4], 8
    %v37 = vld [vmem:[%s36] sm:$0xff]
    %v38 = vstv %s32
    %v39 = vmul.f32 %v35, %v38
    %v40 = vstv %s33
    %v41 = vmul.f32 %v37, %v40
    %v42 = vadd.f32 %v39, %v41
    %v43 = vstv %s34
    %v44 = vadd.f32 %v42, %v43
    %v45 = vsub.f32 0.0, %v44
    %v46 = vmul.f32 %v45, 1.442695
    %v47 = vpow.pop %v46
    %v48 = vadd.f32 %v47, 1.0
    %v49 = vrcp.pop %v48
    %50 = vst [vmem:[%s2] sm:$0xff] %v49
    // Predicated region
    $region14: #{linear_classifier_forward.2} parent=1 // pred_check
      _
    $region15: #{linear_classifier_forward.2} parent=1 // pred_check_branch
      %52 = sbr.rel (0) target = $region17
    $region16: #{linear_classifier_forward.2} parent=1 // pred_region
      _
    $region17: #{linear_classifier_forward.2} parent=1 // pred_fallthru
      _
    // Predicated region
    $region18: #{linear_classifier_forward.2} parent=1 // pred_check
      _
    $region19: #{linear_classifier_forward.2} parent=1 // pred_check_branch
      %54 = sbr.rel (0) target = $region21
    $region20: #{linear_classifier_forward.2} parent=1 // pred_region
      _
    $region21: #{linear_classifier_forward.2} parent=1 // pred_fallthru
      _
    %55 = vsyncpa [#allocation3], 1

</llo_original>
